<compile_context>
chip_gen: v6e
topology: v6e:2x2x1
jax: 0.10.0
libtpu: 0.0.40
codegen_flags: <defaults>
</compile_context>

<pallas_src>
import functools

import jax
import jax.numpy as jnp
from jax.experimental import pallas as pl
from jax.experimental.pallas import tpu as pltpu

POS_MEAN = 13.635
POS_VAR = 61.97
HIDDEN = 128


def _softplus(x):
    # numerically-stable softplus == torch.nn.Softplus default
    # (torch applies a linear passthrough for x > 20; logaddexp is exact, the
    #  difference is ~1e-7-level and within the comparison tolerance)
    return jnp.logaddexp(x, 0.0)


def sonode_kernel(pv_ref,
                  w_cat_ref, fp_b1_ref, fp_w2_ref, fp_b2_ref,
                  w_ff_ref, fc_b1_ref, fc_w2_ref, fc_b2_ref,
                  fc_w3_ref, fc_b3_ref,
                  out_ref):
    mdt = w_cat_ref.dtype          # matmul-operand dtype (bf16 perf mode / f32)
    pv = pv_ref[...]               # (TM, 6) f32

    # --- single MXU pass for BOTH K=6 matmuls ---------------------------------
    # W_cat = [ fp_w1_fused (denorm folded, padded 3->6) | fc_w1[:6,:] ]  (6,256)
    #   r[:, :128] -> force-predictor layer-1 pre-activation (minus bias)
    #   r[:, 128:] -> pos_vel contribution to fc layer 1
    r = jnp.dot(pv.astype(mdt), w_cat_ref[...],
                preferred_element_type=jnp.float32)                      # (TM,256) f32

    # --- force-predictor hidden stack ---
    h = _softplus(r[:, :HIDDEN] + fp_b1_ref[...])
    h = _softplus(jnp.dot(h.astype(mdt), fp_w2_ref[...],
                          preferred_element_type=jnp.float32) + fp_b2_ref[...])

    # --- fc layer 1 with the force output layer fused in:
    #     softplus(pv @ fc_w1[:6,:] + h @ (fp_w3 @ fc_w1[6:9,:])
    #              + (fc_b1 + fp_b3 @ fc_w1[6:9,:]))
    #     (no concat, no skinny K=3 / N=3 matmuls, no (N,3) intermediate) ---
    g = _softplus(r[:, HIDDEN:]
                  + jnp.dot(h.astype(mdt), w_ff_ref[...],
                            preferred_element_type=jnp.float32)
                  + fc_b1_ref[...])
    g = _softplus(jnp.dot(g.astype(mdt), fc_w2_ref[...],
                          preferred_element_type=jnp.float32) + fc_b2_ref[...])
    out_ref[...] = jnp.dot(g.astype(mdt), fc_w3_ref[...],
                           preferred_element_type=jnp.float32) + fc_b3_ref[...]


def fuse_params(params, matmul_dtype=jnp.bfloat16):
    """Offline algebraic fusion of the raw (PyTorch-equivalent) parameters.

    All fusion math is done in f32; only the MXU-operand weights are cast to
    `matmul_dtype` at the end.  Biases stay f32 (added post-accumulation).
    """
    (fp_w1, fp_b1, fp_w2, fp_b2, fp_w3, fp_b3,
     fc_w1, fc_b1, fc_w2, fc_b2, fc_w3, fc_b3) = params
    hid = fp_w1.shape[1]
    std = jnp.sqrt(jnp.asarray(POS_VAR, jnp.float32))

    # fold denormalize_pos into force-predictor layer 1, pad contraction 3 -> 6
    fp_w1_fused = jnp.concatenate(
        [std * fp_w1, jnp.zeros((3, hid), jnp.float32)], axis=0)            # (6, H)
    fp_b1_fused = POS_MEAN * jnp.sum(fp_w1, axis=0, keepdims=True) + fp_b1  # (1, H)

    # fuse the two K=6 matmuls into one (6, 2H) weight (lane slice at 128 boundary)
    w_cat = jnp.concatenate([fp_w1_fused, fc_w1[:6, :]], axis=1)            # (6, 2H)

    # fold the force output layer into fc layer 1
    w_ff = fp_w3 @ fc_w1[6:9, :]                                            # (H, H)
    fc_b1_fused = fc_b1 + fp_b3 @ fc_w1[6:9, :]                             # (1, H)

    mdt = jnp.dtype(matmul_dtype)
    cast = lambda w: w.astype(mdt)
    return (cast(w_cat), fp_b1_fused, cast(fp_w2), fp_b2,
            cast(w_ff), fc_b1_fused, cast(fc_w2), fc_b2,
            cast(fc_w3), fc_b3)


def _round_up(x, m):
    return ((x + m - 1) // m) * m


@functools.partial(jax.jit, static_argnames=("block_m",))
def sonode_forward(pos_vel, t, fused_params, *, block_m=2048):
    # TODO(synk): `t` is accepted for ODE-solver API parity but (as in the
    # reference forward) is not used in the computation.
    del t
    n = pos_vel.shape[0]
    # Batch tile (multiple of 8).  Split the batch into at least two tiles when
    # it fits within 2*block_m so v7x's two TensorCores both get a grid step
    # (harmless extra sequential step on v5e/v6e, which have one TC).
    tm = max(8, min(block_m, _round_up(pl.cdiv(n, 2), 8)))
    grid = (pl.cdiv(n, tm),)

    # input/output tiles move through the grid; weights stay VMEM-resident
    # (constant index_map -> DMA'd once, reused for every batch tile).
    io_spec = pl.BlockSpec((tm, 6), lambda i: (i, 0))
    weight_specs = [pl.BlockSpec(w.shape, lambda i: (0, 0)) for w in fused_params]

    weight_bytes = sum(int(w.size) * w.dtype.itemsize for w in fused_params)
    flops = 2 * n * (6 * 2 * HIDDEN          # fused pv @ W_cat  (fp layer1 + fc layer1 pv-part)
                     + HIDDEN * HIDDEN       # fp layer 2
                     + HIDDEN * HIDDEN       # fused force->fc bridge (W_ff)
                     + HIDDEN * HIDDEN       # fc layer 2
                     + HIDDEN * 6)           # fc layer 3
    cost = pl.CostEstimate(
        flops=flops,
        # 4 softplus layers over (n, HIDDEN); logaddexp = one exp + one log1p each
        transcendentals=8 * n * HIDDEN,
        bytes_accessed=weight_bytes + n * 6 * 4 * 2,
    )

    return pl.pallas_call(
        sonode_kernel,
        out_shape=jax.ShapeDtypeStruct((n, 6), jnp.float32),
        grid=grid,
        in_specs=[io_spec] + weight_specs,
        out_specs=io_spec,
        compiler_params=pltpu.CompilerParams(
            dimension_semantics=("parallel",),          # 2x on v7x megacore
            vmem_limit_bytes=48 * 1024 * 1024,          # headroom for big tiles on v7x's 64 MiB VMEM
        ),
        cost_estimate=cost,
    )(pos_vel, *fused_params)


def init_mlp_params(key, dims):
    """Deterministic xavier-uniform-ish init for an MLP dims[0]->...->dims[-1]."""
    params = []
    for i in range(len(dims) - 1):
        key, kw = jax.random.split(key)
        fan_in, fan_out = dims[i], dims[i + 1]
        limit = jnp.sqrt(6.0 / (fan_in + fan_out))
        w = jax.random.uniform(kw, (fan_in, fan_out), jnp.float32, -limit, limit)
        b = jnp.zeros((1, fan_out), jnp.float32)       # 2-D biases for TPU layout
        params += [w, b]
    return params, key


def reference_forward(pos_vel, params):
    """Pure-JAX reference with the ORIGINAL (unfused) parameters / op order."""
    (fp_w1, fp_b1, fp_w2, fp_b2, fp_w3, fp_b3,
     fc_w1, fc_b1, fc_w2, fc_b2, fc_w3, fc_b3) = params
    pos_dn = pos_vel[:, :3] * jnp.sqrt(jnp.float32(POS_VAR)) + jnp.float32(POS_MEAN)
    h = jax.nn.softplus(pos_dn @ fp_w1 + fp_b1)
    h = jax.nn.softplus(h @ fp_w2 + fp_b2)
    force = h @ fp_w3 + fp_b3
    x = jnp.concatenate([pos_vel, force], axis=1)
    g = jax.nn.softplus(x @ fc_w1 + fc_b1)
    g = jax.nn.softplus(g @ fc_w2 + fc_b2)
    return g @ fc_w3 + fc_b3


if __name__ == "__main__":
    key = jax.random.PRNGKey(0)

    # force_predictor: MLP(3 -> 128 -> 128 -> 3), fc: MLP(9 -> 128 -> 128 -> 6)
    fp_params, key = init_mlp_params(key, (3, HIDDEN, HIDDEN, 3))
    fc_params, key = init_mlp_params(key, (9, HIDDEN, HIDDEN, 6))
    raw_params = tuple(fp_params + fc_params)

    key, kx = jax.random.split(key)
    N = 8
    pos_vel = jax.random.normal(kx, (N, 6), dtype=jnp.float32)  # [batch, (pos3, vel3)]
    t = jnp.float32(0.0)

    ref = reference_forward(pos_vel, raw_params)

    # 1) f32-operand mode: the offline algebraic fusion must be numerically exact.
    out_f32 = jax.block_until_ready(
        sonode_forward(pos_vel, t, fuse_params(raw_params, jnp.float32)))
    assert out_f32.shape == (N, 6)
    assert jnp.allclose(out_f32, ref, atol=1e-4, rtol=1e-4), "f32 kernel mismatch vs. reference"

    # 2) bf16-operand perf mode (f32 MXU accumulation): end-to-end error must stay
    #    within a few bf16 ulps of the output scale (five matmul layers deep).
    out_bf16 = jax.block_until_ready(
        sonode_forward(pos_vel, t, fuse_params(raw_params, jnp.bfloat16)))
    assert out_bf16.shape == (N, 6)
    err = float(jnp.max(jnp.abs(out_bf16 - ref)))
    scale = float(jnp.max(jnp.abs(ref)))
    assert err <= 0.05 * scale + 0.05, f"bf16 kernel error too large: {err} (scale {scale})"

    print("KERNEL_OK")
</pallas_src>

<mosaic_0001>
module attributes {stable_mosaic.version = 11 : i64} {
  func.func @sonode_kernel(%arg0: i32, %arg1: memref<8x6xf32, #tpu.memory_space<vmem>>, %arg2: memref<6x256xf32, #tpu.memory_space<vmem>>, %arg3: memref<1x128xf32, #tpu.memory_space<vmem>>, %arg4: memref<128x128xf32, #tpu.memory_space<vmem>>, %arg5: memref<1x128xf32, #tpu.memory_space<vmem>>, %arg6: memref<128x128xf32, #tpu.memory_space<vmem>>, %arg7: memref<1x128xf32, #tpu.memory_space<vmem>>, %arg8: memref<128x128xf32, #tpu.memory_space<vmem>>, %arg9: memref<1x128xf32, #tpu.memory_space<vmem>>, %arg10: memref<128x6xf32, #tpu.memory_space<vmem>>, %arg11: memref<1x6xf32, #tpu.memory_space<vmem>>, %arg12: memref<8x6xf32, #tpu.memory_space<vmem>>) attributes {dimension_semantics = [#tpu.dimension_semantics<parallel>], iteration_bounds = array<i64: 1>, scalar_prefetch = 0 : i64, scratch_operands = 0 : i64, tpu.core_type = #tpu.core_type<tc>, window_params = [{transform_indices = @transform_0, window_bounds = array<i64: 8, 6>}, {pipeline_mode = #tpu.pipeline_mode<synchronous>, transform_indices = @transform_1, window_bounds = array<i64: 6, 256>}, {pipeline_mode = #tpu.pipeline_mode<synchronous>, transform_indices = @transform_2, window_bounds = array<i64: 1, 128>}, {pipeline_mode = #tpu.pipeline_mode<synchronous>, transform_indices = @transform_3, window_bounds = array<i64: 128, 128>}, {pipeline_mode = #tpu.pipeline_mode<synchronous>, transform_indices = @transform_4, window_bounds = array<i64: 1, 128>}, {pipeline_mode = #tpu.pipeline_mode<synchronous>, transform_indices = @transform_5, window_bounds = array<i64: 128, 128>}, {pipeline_mode = #tpu.pipeline_mode<synchronous>, transform_indices = @transform_6, window_bounds = array<i64: 1, 128>}, {pipeline_mode = #tpu.pipeline_mode<synchronous>, transform_indices = @transform_7, window_bounds = array<i64: 128, 128>}, {pipeline_mode = #tpu.pipeline_mode<synchronous>, transform_indices = @transform_8, window_bounds = array<i64: 1, 128>}, {pipeline_mode = #tpu.pipeline_mode<synchronous>, transform_indices = @transform_9, window_bounds = array<i64: 128, 6>}, {pipeline_mode = #tpu.pipeline_mode<synchronous>, transform_indices = @transform_10, window_bounds = array<i64: 1, 6>}, {transform_indices = @transform_11, window_bounds = array<i64: 8, 6>}]} {
    %c0 = arith.constant 0 : index
    %c0_0 = arith.constant 0 : index
    %0 = vector.load %arg1[%c0, %c0_0] : memref<8x6xf32, #tpu.memory_space<vmem>>, vector<8x6xf32>
    %c0_1 = arith.constant 0 : index
    %c0_2 = arith.constant 0 : index
    %1 = vector.load %arg2[%c0_1, %c0_2] : memref<6x256xf32, #tpu.memory_space<vmem>>, vector<6x256xf32>
    %cst = arith.constant dense<0.000000e+00> : vector<8x256xf32>
    %2 = tpu.matmul %0, %1, %cst {dimension_numbers = #tpu.dot_dimension_numbers<[1], [0], [0], [1], [0, 0, 1, 1], [], []>} : vector<8x6xf32>, vector<6x256xf32>, vector<8x256xf32> -> vector<8x256xf32>
    %3 = vector.extract_strided_slice %2 {offsets = [0, 0], sizes = [8, 128], strides = [1, 1]} : vector<8x256xf32> to vector<8x128xf32>
    %c0_3 = arith.constant 0 : index
    %c0_4 = arith.constant 0 : index
    %4 = vector.load %arg3[%c0_3, %c0_4] : memref<1x128xf32, #tpu.memory_space<vmem>>, vector<1x128xf32>
    %5 = vector.broadcast %4 : vector<1x128xf32> to vector<8x128xf32>
    %6 = arith.addf %3, %5 : vector<8x128xf32>
    %cst_5 = arith.constant 0.000000e+00 : f32
    %7 = vector.broadcast %cst_5 : f32 to vector<8x128xf32>
    %8 = arith.maximumf %6, %7 : vector<8x128xf32>
    %9 = vector.broadcast %cst_5 : f32 to vector<8x128xf32>
    %10 = arith.subf %6, %9 : vector<8x128xf32>
    %11 = arith.cmpf one, %10, %10 : vector<8x128xf32>
    %12 = vector.broadcast %cst_5 : f32 to vector<8x128xf32>
    %13 = arith.addf %6, %12 : vector<8x128xf32>
    %14 = math.absf %10 : vector<8x128xf32>
    %cst_6 = arith.constant 0.000000e+00 : f32
    %15 = vector.broadcast %cst_6 : f32 to vector<8x128xf32>
    %16 = arith.subf %15, %14 : vector<8x128xf32>
    %17 = math.exp %16 : vector<8x128xf32>
    %18 = math.log1p %17 : vector<8x128xf32>
    %19 = arith.addf %8, %18 : vector<8x128xf32>
    %20 = arith.select %11, %13, %19 : vector<8x128xi1>, vector<8x128xf32>
    %c0_7 = arith.constant 0 : index
    %c0_8 = arith.constant 0 : index
    %21 = vector.load %arg4[%c0_7, %c0_8] : memref<128x128xf32, #tpu.memory_space<vmem>>, vector<128x128xf32>
    %cst_9 = arith.constant dense<0.000000e+00> : vector<8x128xf32>
    %22 = tpu.matmul %20, %21, %cst_9 {dimension_numbers = #tpu.dot_dimension_numbers<[1], [0], [0], [1], [0, 0, 1, 1], [], []>} : vector<8x128xf32>, vector<128x128xf32>, vector<8x128xf32> -> vector<8x128xf32>
    %c0_10 = arith.constant 0 : index
    %c0_11 = arith.constant 0 : index
    %23 = vector.load %arg5[%c0_10, %c0_11] : memref<1x128xf32, #tpu.memory_space<vmem>>, vector<1x128xf32>
    %24 = vector.broadcast %23 : vector<1x128xf32> to vector<8x128xf32>
    %25 = arith.addf %22, %24 : vector<8x128xf32>
    %cst_12 = arith.constant 0.000000e+00 : f32
    %26 = vector.broadcast %cst_12 : f32 to vector<8x128xf32>
    %27 = arith.maximumf %25, %26 : vector<8x128xf32>
    %28 = vector.broadcast %cst_12 : f32 to vector<8x128xf32>
    %29 = arith.subf %25, %28 : vector<8x128xf32>
    %30 = arith.cmpf one, %29, %29 : vector<8x128xf32>
    %31 = vector.broadcast %cst_12 : f32 to vector<8x128xf32>
    %32 = arith.addf %25, %31 : vector<8x128xf32>
    %33 = math.absf %29 : vector<8x128xf32>
    %cst_13 = arith.constant 0.000000e+00 : f32
    %34 = vector.broadcast %cst_13 : f32 to vector<8x128xf32>
    %35 = arith.subf %34, %33 : vector<8x128xf32>
    %36 = math.exp %35 : vector<8x128xf32>
    %37 = math.log1p %36 : vector<8x128xf32>
    %38 = arith.addf %27, %37 : vector<8x128xf32>
    %39 = arith.select %30, %32, %38 : vector<8x128xi1>, vector<8x128xf32>
    %40 = vector.extract_strided_slice %2 {offsets = [0, 128], sizes = [8, 128], strides = [1, 1]} : vector<8x256xf32> to vector<8x128xf32>
    %c0_14 = arith.constant 0 : index
    %c0_15 = arith.constant 0 : index
    %41 = vector.load %arg6[%c0_14, %c0_15] : memref<128x128xf32, #tpu.memory_space<vmem>>, vector<128x128xf32>
    %cst_16 = arith.constant dense<0.000000e+00> : vector<8x128xf32>
    %42 = tpu.matmul %39, %41, %cst_16 {dimension_numbers = #tpu.dot_dimension_numbers<[1], [0], [0], [1], [0, 0, 1, 1], [], []>} : vector<8x128xf32>, vector<128x128xf32>, vector<8x128xf32> -> vector<8x128xf32>
    %43 = arith.addf %40, %42 : vector<8x128xf32>
    %c0_17 = arith.constant 0 : index
    %c0_18 = arith.constant 0 : index
    %44 = vector.load %arg7[%c0_17, %c0_18] : memref<1x128xf32, #tpu.memory_space<vmem>>, vector<1x128xf32>
    %45 = vector.broadcast %44 : vector<1x128xf32> to vector<8x128xf32>
    %46 = arith.addf %43, %45 : vector<8x128xf32>
    %cst_19 = arith.constant 0.000000e+00 : f32
    %47 = vector.broadcast %cst_19 : f32 to vector<8x128xf32>
    %48 = arith.maximumf %46, %47 : vector<8x128xf32>
    %49 = vector.broadcast %cst_19 : f32 to vector<8x128xf32>
    %50 = arith.subf %46, %49 : vector<8x128xf32>
    %51 = arith.cmpf one, %50, %50 : vector<8x128xf32>
    %52 = vector.broadcast %cst_19 : f32 to vector<8x128xf32>
    %53 = arith.addf %46, %52 : vector<8x128xf32>
    %54 = math.absf %50 : vector<8x128xf32>
    %cst_20 = arith.constant 0.000000e+00 : f32
    %55 = vector.broadcast %cst_20 : f32 to vector<8x128xf32>
    %56 = arith.subf %55, %54 : vector<8x128xf32>
    %57 = math.exp %56 : vector<8x128xf32>
    %58 = math.log1p %57 : vector<8x128xf32>
    %59 = arith.addf %48, %58 : vector<8x128xf32>
    %60 = arith.select %51, %53, %59 : vector<8x128xi1>, vector<8x128xf32>
    %c0_21 = arith.constant 0 : index
    %c0_22 = arith.constant 0 : index
    %61 = vector.load %arg8[%c0_21, %c0_22] : memref<128x128xf32, #tpu.memory_space<vmem>>, vector<128x128xf32>
    %cst_23 = arith.constant dense<0.000000e+00> : vector<8x128xf32>
    %62 = tpu.matmul %60, %61, %cst_23 {dimension_numbers = #tpu.dot_dimension_numbers<[1], [0], [0], [1], [0, 0, 1, 1], [], []>} : vector<8x128xf32>, vector<128x128xf32>, vector<8x128xf32> -> vector<8x128xf32>
    %c0_24 = arith.constant 0 : index
    %c0_25 = arith.constant 0 : index
    %63 = vector.load %arg9[%c0_24, %c0_25] : memref<1x128xf32, #tpu.memory_space<vmem>>, vector<1x128xf32>
    %64 = vector.broadcast %63 : vector<1x128xf32> to vector<8x128xf32>
    %65 = arith.addf %62, %64 : vector<8x128xf32>
    %cst_26 = arith.constant 0.000000e+00 : f32
    %66 = vector.broadcast %cst_26 : f32 to vector<8x128xf32>
    %67 = arith.maximumf %65, %66 : vector<8x128xf32>
    %68 = vector.broadcast %cst_26 : f32 to vector<8x128xf32>
    %69 = arith.subf %65, %68 : vector<8x128xf32>
    %70 = arith.cmpf one, %69, %69 : vector<8x128xf32>
    %71 = vector.broadcast %cst_26 : f32 to vector<8x128xf32>
    %72 = arith.addf %65, %71 : vector<8x128xf32>
    %73 = math.absf %69 : vector<8x128xf32>
    %cst_27 = arith.constant 0.000000e+00 : f32
    %74 = vector.broadcast %cst_27 : f32 to vector<8x128xf32>
    %75 = arith.subf %74, %73 : vector<8x128xf32>
    %76 = math.exp %75 : vector<8x128xf32>
    %77 = math.log1p %76 : vector<8x128xf32>
    %78 = arith.addf %67, %77 : vector<8x128xf32>
    %79 = arith.select %70, %72, %78 : vector<8x128xi1>, vector<8x128xf32>
    %c0_28 = arith.constant 0 : index
    %c0_29 = arith.constant 0 : index
    %80 = vector.load %arg10[%c0_28, %c0_29] : memref<128x6xf32, #tpu.memory_space<vmem>>, vector<128x6xf32>
    %cst_30 = arith.constant dense<0.000000e+00> : vector<8x6xf32>
    %81 = tpu.matmul %79, %80, %cst_30 {dimension_numbers = #tpu.dot_dimension_numbers<[1], [0], [0], [1], [0, 0, 1, 1], [], []>} : vector<8x128xf32>, vector<128x6xf32>, vector<8x6xf32> -> vector<8x6xf32>
    %c0_31 = arith.constant 0 : index
    %c0_32 = arith.constant 0 : index
    %82 = vector.load %arg11[%c0_31, %c0_32] : memref<1x6xf32, #tpu.memory_space<vmem>>, vector<1x6xf32>
    %83 = vector.broadcast %82 : vector<1x6xf32> to vector<8x6xf32>
    %84 = arith.addf %81, %83 : vector<8x6xf32>
    %c0_33 = arith.constant 0 : index
    %c0_34 = arith.constant 0 : index
    %85 = vector.load %arg12[%c0_33, %c0_34] : memref<8x6xf32, #tpu.memory_space<vmem>>, vector<8x6xf32>
    tpu.vector_store %arg12[%c0_33, %c0_34], %84 {strides = array<i32>} : memref<8x6xf32, #tpu.memory_space<vmem>>, vector<8x6xf32>,
    return
  }
  func.func @transform_0(%arg0: i32) -> (i32, i32) {
    %c0_i32 = arith.constant 0 : i32
    %c0_i32_0 = arith.constant 0 : i32
    return %arg0, %c0_i32 : i32, i32
  }
  func.func @transform_1(%arg0: i32) -> (i32, i32) {
    %c0_i32 = arith.constant 0 : i32
    %c0_i32_0 = arith.constant 0 : i32
    %c0_i32_1 = arith.constant 0 : i32
    return %c0_i32, %c0_i32_0 : i32, i32
  }
  func.func @transform_2(%arg0: i32) -> (i32, i32) {
    %c0_i32 = arith.constant 0 : i32
    %c0_i32_0 = arith.constant 0 : i32
    %c0_i32_1 = arith.constant 0 : i32
    return %c0_i32, %c0_i32_0 : i32, i32
  }
  func.func @transform_3(%arg0: i32) -> (i32, i32) {
    %c0_i32 = arith.constant 0 : i32
    %c0_i32_0 = arith.constant 0 : i32
    %c0_i32_1 = arith.constant 0 : i32
    return %c0_i32, %c0_i32_0 : i32, i32
  }
  func.func @transform_4(%arg0: i32) -> (i32, i32) {
    %c0_i32 = arith.constant 0 : i32
    %c0_i32_0 = arith.constant 0 : i32
    %c0_i32_1 = arith.constant 0 : i32
    return %c0_i32, %c0_i32_0 : i32, i32
  }
  func.func @transform_5(%arg0: i32) -> (i32, i32) {
    %c0_i32 = arith.constant 0 : i32
    %c0_i32_0 = arith.constant 0 : i32
    %c0_i32_1 = arith.constant 0 : i32
    return %c0_i32, %c0_i32_0 : i32, i32
  }
  func.func @transform_6(%arg0: i32) -> (i32, i32) {
    %c0_i32 = arith.constant 0 : i32
    %c0_i32_0 = arith.constant 0 : i32
    %c0_i32_1 = arith.constant 0 : i32
    return %c0_i32, %c0_i32_0 : i32, i32
  }
  func.func @transform_7(%arg0: i32) -> (i32, i32) {
    %c0_i32 = arith.constant 0 : i32
    %c0_i32_0 = arith.constant 0 : i32
    %c0_i32_1 = arith.constant 0 : i32
    return %c0_i32, %c0_i32_0 : i32, i32
  }
  func.func @transform_8(%arg0: i32) -> (i32, i32) {
    %c0_i32 = arith.constant 0 : i32
    %c0_i32_0 = arith.constant 0 : i32
    %c0_i32_1 = arith.constant 0 : i32
    return %c0_i32, %c0_i32_0 : i32, i32
  }
  func.func @transform_9(%arg0: i32) -> (i32, i32) {
    %c0_i32 = arith.constant 0 : i32
    %c0_i32_0 = arith.constant 0 : i32
    %c0_i32_1 = arith.constant 0 : i32
    return %c0_i32, %c0_i32_0 : i32, i32
  }
  func.func @transform_10(%arg0: i32) -> (i32, i32) {
    %c0_i32 = arith.constant 0 : i32
    %c0_i32_0 = arith.constant 0 : i32
    %c0_i32_1 = arith.constant 0 : i32
    return %c0_i32, %c0_i32_0 : i32, i32
  }
  func.func @transform_11(%arg0: i32) -> (i32, i32) {
    %c0_i32 = arith.constant 0 : i32
    %c0_i32_0 = arith.constant 0 : i32
    return %arg0, %c0_i32 : i32, i32
  }
}

</mosaic_0001>

<llo_original>
// kernel: sonode_forward.1
$region0: #{sonode_forward.1}
  #allocation0 [shape = 'u32[]', space=smem, size = 0x4, offset = 0x4, fixed_abs, tag = 'smem constant byte address 0x4 - core index']
  #allocation1 [shape = 'u32[144,128]{1,0:T(1,128)}', space=vmem, size = 0x12000, scoped, tag = 'internal scratch']
  %s0 = inlined_call_operand.vmem [shape: f32[8,6], index: 0, kind: input, shape index: {}]
  %s1 = inlined_call_operand.hbm [shape: f32[6,256], index: 1, kind: input, shape index: {}]
  %s2 = inlined_call_operand.vmem [shape: f32[1,128], index: 2, kind: input, shape index: {}]
  %s3 = inlined_call_operand.vmem [shape: f32[128,128], index: 3, kind: input, shape index: {}]
  %s4 = inlined_call_operand.vmem [shape: f32[1,128], index: 4, kind: input, shape index: {}]
  %s5 = inlined_call_operand.hbm [shape: f32[128,128], index: 5, kind: input, shape index: {}]
  %s6 = inlined_call_operand.vmem [shape: f32[1,128], index: 6, kind: input, shape index: {}]
  %s7 = inlined_call_operand.hbm [shape: f32[128,128], index: 7, kind: input, shape index: {}]
  %s8 = inlined_call_operand.vmem [shape: f32[1,128], index: 8, kind: input, shape index: {}]
  %s9 = inlined_call_operand.vmem [shape: f32[128,6], index: 9, kind: input, shape index: {}]
  %s10 = inlined_call_operand.vmem [shape: f32[1,6], index: 10, kind: input, shape index: {}]
  %s11 = inlined_call_operand.hbm [shape: f32[8,6], index: 11, kind: output, shape index: {}]
  %s12 = sld [smem:[#allocation0]]
  $region66: #{sonode_forward.1} parent=0
    _
  %s14 = ssub.s32 1, %s12
  %s15 = scalar_select 0, %s14, %s12
  $region1: #{sonode_forward.1} parent=0
    #allocation2 [shape = 'u8[8192]{0}', space=vmem, size = 0x2000, scoped, tag = 'input window, operand 1, single buffered']
    #allocation3 [shape = 's32[1]{0}', space=sflag, size = 0x4, scoped, tag = 'scoped memory for sonode_forward.1']
    #allocation4 [shape = 's32[1]{0}', space=sflag, size = 0x4, scoped, tag = 'scoped memory for sonode_forward.1']
    #allocation5 [shape = 'u8[65536]{0}', space=vmem, size = 0x10000, scoped, tag = 'input window, operand 5, single buffered']
    #allocation6 [shape = 's32[1]{0}', space=sflag, size = 0x4, scoped, tag = 'scoped memory for sonode_forward.1']
    #allocation7 [shape = 'u8[65536]{0}', space=vmem, size = 0x10000, scoped, tag = 'input window, operand 7, single buffered']
    #allocation8 [shape = 'u8[4096]{0}', space=vmem, size = 0x1000, scoped, tag = 'output window, operand 0, single buffered']
    %16 = vsyncpa [#allocation3], 0
    %17 = vsyncpa [#allocation6], 0
    %18 = vsyncpa [#allocation4], 0
    // Predicated region
    $region2: #{sonode_forward.1} parent=1 // pred_check
      _
    $region3: #{sonode_forward.1} parent=1 // pred_check_branch
      %20 = sbr.rel (0) target = $region5
    $region4: #{sonode_forward.1} parent=1 // pred_region
      _
    $region5: #{sonode_forward.1} parent=1 // pred_fallthru
      _
    // Predicated region
    $region6: #{sonode_forward.1} parent=1 // pred_check
      _
    $region7: #{sonode_forward.1} parent=1 // pred_check_branch
      %22 = sbr.rel (0) target = $region9
    $region8: #{sonode_forward.1} parent=1 // pred_region
      %s24 = ssub.s32 256, 256
      %25 = vsyncadd [#allocation3], %s24
      %s27 = sshll.u32 [#allocation2], 4
      %s28 = int_to_ptr.vmem [resolvable:$true] %s27
      %30 = dma.hbm_to_vmem [thread:$0]  %s1, 256, %s28, [#allocation3]
    $region9: #{sonode_forward.1} parent=1 // pred_fallthru
      _
    // Predicated region
    $region10: #{sonode_forward.1} parent=1 // pred_check
      _
    $region11: #{sonode_forward.1} parent=1 // pred_check_branch
      %32 = sbr.rel (0) target = $region13
    $region12: #{sonode_forward.1} parent=1 // pred_region
      _
    $region13: #{sonode_forward.1} parent=1 // pred_fallthru
      _
    // Predicated region
    $region14: #{sonode_forward.1} parent=1 // pred_check
      _
    $region15: #{sonode_forward.1} parent=1 // pred_check_branch
      %34 = sbr.rel (0) target = $region17
    $region16: #{sonode_forward.1} parent=1 // pred_region
      _
    $region17: #{sonode_forward.1} parent=1 // pred_fallthru
      _
    // Predicated region
    $region18: #{sonode_forward.1} parent=1 // pred_check
      _
    $region19: #{sonode_forward.1} parent=1 // pred_check_branch
      %36 = sbr.rel (0) target = $region21
    $region20: #{sonode_forward.1} parent=1 // pred_region
      _
    $region21: #{sonode_forward.1} parent=1 // pred_fallthru
      _
    // Predicated region
    $region22: #{sonode_forward.1} parent=1 // pred_check
      _
    $region23: #{sonode_forward.1} parent=1 // pred_check_branch
      %38 = sbr.rel (0) target = $region25
    $region24: #{sonode_forward.1} parent=1 // pred_region
      %s40 = ssub.s32 2048, 2048
      %41 = vsyncadd [#allocation6], %s40
      %s42 = sshll.u32 [#allocation5], 4
      %s43 = int_to_ptr.vmem [resolvable:$true] %s42
      %48 = dma.hbm_to_vmem [thread:$0]  %s5, 2048, %s43, [#allocation6], 128, 128, 8
    $region25: #{sonode_forward.1} parent=1 // pred_fallthru
      _
    // Predicated region
    $region26: #{sonode_forward.1} parent=1 // pred_check
      _
    $region27: #{sonode_forward.1} parent=1 // pred_check_branch
      %50 = sbr.rel (0) target = $region29
    $region28: #{sonode_forward.1} parent=1 // pred_region
      _
    $region29: #{sonode_forward.1} parent=1 // pred_fallthru
      _
    // Predicated region
    $region30: #{sonode_forward.1} parent=1 // pred_check
      _
    $region31: #{sonode_forward.1} parent=1 // pred_check_branch
      %52 = sbr.rel (0) target = $region33
    $region32: #{sonode_forward.1} parent=1 // pred_region
      %s54 = ssub.s32 2048, 2048
      %55 = vsyncadd [#allocation6], %s54
      %s56 = sshll.u32 [#allocation7], 4
      %s57 = int_to_ptr.vmem [resolvable:$true] %s56
      %62 = dma.hbm_to_vmem [thread:$0]  %s7, 2048, %s57, [#allocation6], 128, 128, 8
    $region33: #{sonode_forward.1} parent=1 // pred_fallthru
      _
    // Predicated region
    $region34: #{sonode_forward.1} parent=1 // pred_check
      _
    $region35: #{sonode_forward.1} parent=1 // pred_check_branch
      %64 = sbr.rel (0) target = $region37
    $region36: #{sonode_forward.1} parent=1 // pred_region
      _
    $region37: #{sonode_forward.1} parent=1 // pred_fallthru
      _
    // Predicated region
    $region38: #{sonode_forward.1} parent=1 // pred_check
      _
    $region39: #{sonode_forward.1} parent=1 // pred_check_branch
      %66 = sbr.rel (0) target = $region41
    $region40: #{sonode_forward.1} parent=1 // pred_region
      _
    $region41: #{sonode_forward.1} parent=1 // pred_fallthru
      _
    // Predicated region
    $region42: #{sonode_forward.1} parent=1 // pred_check
      _
    $region43: #{sonode_forward.1} parent=1 // pred_check_branch
      %68 = sbr.rel (0) target = $region45
    $region44: #{sonode_forward.1} parent=1 // pred_region
      _
    $region45: #{sonode_forward.1} parent=1 // pred_fallthru
      _
    // Predicated region
    $region46: #{sonode_forward.1} parent=1 // pred_check
      _
    $region47: #{sonode_forward.1} parent=1 // pred_check_branch
      %70 = sbr.rel (0) target = $region49
    $region48: #{sonode_forward.1} parent=1 // pred_region
      %71 = dma.done [#allocation3], 256
    $region49: #{sonode_forward.1} parent=1 // pred_fallthru
      _
    // Predicated region
    $region50: #{sonode_forward.1} parent=1 // pred_check
      _
    $region51: #{sonode_forward.1} parent=1 // pred_check_branch
      %73 = sbr.rel (0) target = $region53
    $region52: #{sonode_forward.1} parent=1 // pred_region
      %74 = dma.done [#allocation6], 2048
    $region53: #{sonode_forward.1} parent=1 // pred_fallthru
      _
    // Predicated region
    $region54: #{sonode_forward.1} parent=1 // pred_check
      _
    $region55: #{sonode_forward.1} parent=1 // pred_check_branch
      %76 = sbr.rel (0) target = $region57
    $region56: #{sonode_forward.1} parent=1 // pred_region
      %77 = dma.done [#allocation6], 2048
    $region57: #{sonode_forward.1} parent=1 // pred_fallthru
      _
    %v78 = vld [vmem:[%s0] sm:$0xff]
    %v79 = vld [vmem:[#allocation2] sm:$0x3f]
    %v80 = vld [vmem:[#allocation2 + $0x8] sm:$0x3f]
    %vm81 = vcmask 48128
    %v83 = vsel %vm81, %v78, 0
    %vm85 = vcmask 1045504
    %v87 = vsel %vm85, %v79, 0
    %v90 = vsel %vm85, %v80, 0
    %92 = vmatprep.subr.mxu0 0.0
    %93 = vmatpush1.msra.mxu0 0.0
    %94 = vmatprep.subr.mxu0 0.0
    %95 = vmatpush1.msra.mxu0 0.0
    %96 = vmatprep.subr.mxu0 0.0
    %97 = vmatpush1.msra.mxu0 0.0
    %98 = vmatprep.subr.mxu0 0.0
    %99 = vmatpush1.msra.mxu0 0.0
    %100 = vmatprep.subr.mxu0 0.0
    %101 = vmatpush1.msra.mxu0 0.0
    %102 = vmatprep.subr.mxu0 0.0
    %103 = vmatpush1.msra.mxu0 0.0
    %104 = vmatprep.subr.mxu0 0.0
    %105 = vmatpush1.msra.mxu0 0.0
    %106 = vmatprep.subr.mxu0 0.0
    %107 = vmatpush1.msra.mxu0 0.0
    %108 = vmatprep.subr.mxu0 0.0
    %109 = vmatpush1.msra.mxu0 0.0
    %110 = vmatprep.subr.mxu0 0.0
    %111 = vmatpush1.msra.mxu0 0.0
    %112 = vmatprep.subr.mxu0 0.0
    %113 = vmatpush1.msra.mxu0 0.0
    %114 = vmatprep.subr.mxu0 0.0
    %115 = vmatpush1.msra.mxu0 0.0
    %116 = vmatprep.subr.mxu0 0.0
    %117 = vmatpush1.msra.mxu0 0.0
    %118 = vmatprep.subr.mxu0 0.0
    %119 = vmatpush1.msra.mxu0 0.0
    %120 = vmatprep.subr.mxu0 0.0
    %121 = vmatpush1.msra.mxu0 0.0
    %122 = vmatprep.subr.mxu0 %v90
    %123 = vmatpush1.msra.mxu0 %v87
    %124 = vmatprep.subr.mxu0 0.0
    %125 = vmatpush2.msra.mxu0 0.0
    %126 = vmatprep.subr.mxu0 0.0
    %127 = vmatpush2.msra.mxu0 0.0
    %128 = vmatprep.subr.mxu0 0.0
    %129 = vmatpush2.msra.mxu0 0.0
    %130 = vmatprep.subr.mxu0 0.0
    %131 = vmatpush2.msra.mxu0 0.0
    %132 = vmatprep.subr.mxu0 0.0
    %133 = vmatpush2.msra.mxu0 0.0
    %134 = vmatprep.subr.mxu0 0.0
    %135 = vmatpush2.msra.mxu0 0.0
    %136 = vmatprep.subr.mxu0 0.0
    %137 = vmatpush2.msra.mxu0 0.0
    %138 = vmatprep.subr.mxu0 0.0
    %139 = vmatpush2.msra.mxu0 0.0
    %140 = vmatprep.subr.mxu0 0.0
    %141 = vmatpush2.msra.mxu0 0.0
    %142 = vmatprep.subr.mxu0 0.0
    %143 = vmatpush2.msra.mxu0 0.0
    %144 = vmatprep.subr.mxu0 0.0
    %145 = vmatpush2.msra.mxu0 0.0
    %146 = vmatprep.subr.mxu0 0.0
    %147 = vmatpush2.msra.mxu0 0.0
    %148 = vmatprep.subr.mxu0 0.0
    %149 = vmatpush2.msra.mxu0 0.0
    %150 = vmatprep.subr.mxu0 0.0
    %151 = vmatpush2.msra.mxu0 0.0
    %152 = vmatprep.subr.mxu0 0.0
    %153 = vmatpush2.msra.mxu0 0.0
    %154 = vmatprep.subr.mxu0 0.0
    %155 = vmatpush2.msra.mxu0 0.0
    %156 = vmatprep.mubr.f32.mxu0 0.0
    %157 = vmatmul.mubr.f32.gmra.mxu0 %v83
    %v158 = vpop.f32.mrf.mxu0
    %v159 = vadd.f32 0.0, %v158
    %v160 = vpop.f32.mrf.mxu0
    %v161 = vadd.f32 0.0, %v160
    %162 = vdwg.mxu0
    %v163 = vld [vmem:[%s2] sm:$0x1]
    %v165 = vlaneseq
    %v166 = vshrl.u32 %v165, 7
    %v167 = vsub.s32 0, %v166
    %v168 = vrot.slane %v163, %v167
    %v170 = vadd.f32 %v159, %v168
    %v171 = vmax.f32 %v170, 0.0
    %vm172 = vcmp.ne.f32.partialorder %v170, %v170
    %v173 = vadd.f32 %v170, 0.0
    %v174 = vand.u32 2147483647, %v170
    %v175 = vsub.f32 0.0, %v174
    %v176 = vmul.f32 %v175, 1.442695
    %v177 = vpow.pop %v176
    %v178 = vadd.f32 %v177, 1.0
    %v179 = vlog2.pop %v178
    %v180 = vmul.f32 %v179, 0.6931472
    %v181 = vmul.f32 -0.5, %v177
    %v182 = vadd.f32 %v181, 1.0
    %v183 = vmul.f32 %v182, %v177
    %v184 = vand.u32 2147483647, %v177
    %vm185 = vcmp.lt.f32.partialorder %v184, 0.0004427343
    %v186 = vsel %vm185, %v183, %v180
    %v187 = vadd.f32 %v171, %v186
    %v188 = vsel %vm172, %v173, %v187
    %v189 = vld [vmem:[%s3] sm:$0xff]
    %v190 = vld [vmem:[%s3 + $0x8] sm:$0xff]
    %v191 = vld [vmem:[%s3 + $0x10] sm:$0xff]
    %v192 = vld [vmem:[%s3 + $0x18] sm:$0xff]
    %v193 = vld [vmem:[%s3 + $0x20] sm:$0xff]
    %v194 = vld [vmem:[%s3 + $0x28] sm:$0xff]
    %v195 = vld [vmem:[%s3 + $0x30] sm:$0xff]
    %v196 = vld [vmem:[%s3 + $0x38] sm:$0xff]
    %v197 = vld [vmem:[%s3 + $0x40] sm:$0xff]
    %v198 = vld [vmem:[%s3 + $0x48] sm:$0xff]
    %v199 = vld [vmem:[%s3 + $0x50] sm:$0xff]
    %v200 = vld [vmem:[%s3 + $0x58] sm:$0xff]
    %v201 = vld [vmem:[%s3 + $0x60] sm:$0xff]
    %v202 = vld [vmem:[%s3 + $0x68] sm:$0xff]
    %v203 = vld [vmem:[%s3 + $0x70] sm:$0xff]
    %v204 = vld [vmem:[%s3 + $0x78] sm:$0xff]
    %v205 = vld [vmem:[%s4] sm:$0x1]
    %v207 = vlaneseq
    %v208 = vshrl.u32 %v207, 7
    %v209 = vsub.s32 0, %v208
    %v210 = vrot.slane %v205, %v209
    %212 = vmatprep.subr.mxu0 0.0
    %213 = vmatpush1.msra.mxu0 %v204
    %214 = vmatprep.subr.mxu0 0.0
    %215 = vmatpush1.msra.mxu0 %v203
    %216 = vmatprep.subr.mxu0 0.0
    %217 = vmatpush1.msra.mxu0 %v202
    %218 = vmatprep.subr.mxu0 0.0
    %219 = vmatpush1.msra.mxu0 %v201
    %220 = vmatprep.subr.mxu0 0.0
    %221 = vmatpush1.msra.mxu0 %v200
    %222 = vmatprep.subr.mxu0 0.0
    %223 = vmatpush1.msra.mxu0 %v199
    %224 = vmatprep.subr.mxu0 0.0
    %225 = vmatpush1.msra.mxu0 %v198
    %226 = vmatprep.subr.mxu0 0.0
    %227 = vmatpush1.msra.mxu0 %v197
    %228 = vmatprep.subr.mxu0 0.0
    %229 = vmatpush1.msra.mxu0 %v196
    %230 = vmatprep.subr.mxu0 0.0
    %231 = vmatpush1.msra.mxu0 %v195
    %232 = vmatprep.subr.mxu0 0.0
    %233 = vmatpush1.msra.mxu0 %v194
    %234 = vmatprep.subr.mxu0 0.0
    %235 = vmatpush1.msra.mxu0 %v193
    %236 = vmatprep.subr.mxu0 0.0
    %237 = vmatpush1.msra.mxu0 %v192
    %238 = vmatprep.subr.mxu0 0.0
    %239 = vmatpush1.msra.mxu0 %v191
    %240 = vmatprep.subr.mxu0 0.0
    %241 = vmatpush1.msra.mxu0 %v190
    %242 = vmatprep.subr.mxu0 0.0
    %243 = vmatpush1.msra.mxu0 %v189
    %244 = vmatprep.subr.mxu0 0.0
    %245 = vmatpush2.msra.mxu0 0.0
    %246 = vmatprep.subr.mxu0 0.0
    %247 = vmatpush2.msra.mxu0 0.0
    %248 = vmatprep.subr.mxu0 0.0
    %249 = vmatpush2.msra.mxu0 0.0
    %250 = vmatprep.subr.mxu0 0.0
    %251 = vmatpush2.msra.mxu0 0.0
    %252 = vmatprep.subr.mxu0 0.0
    %253 = vmatpush2.msra.mxu0 0.0
    %254 = vmatprep.subr.mxu0 0.0
    %255 = vmatpush2.msra.mxu0 0.0
    %256 = vmatprep.subr.mxu0 0.0
    %257 = vmatpush2.msra.mxu0 0.0
    %258 = vmatprep.subr.mxu0 0.0
    %259 = vmatpush2.msra.mxu0 0.0
    %260 = vmatprep.subr.mxu0 0.0
    %261 = vmatpush2.msra.mxu0 0.0
    %262 = vmatprep.subr.mxu0 0.0
    %263 = vmatpush2.msra.mxu0 0.0
    %264 = vmatprep.subr.mxu0 0.0
    %265 = vmatpush2.msra.mxu0 0.0
    %266 = vmatprep.subr.mxu0 0.0
    %267 = vmatpush2.msra.mxu0 0.0
    %268 = vmatprep.subr.mxu0 0.0
    %269 = vmatpush2.msra.mxu0 0.0
    %270 = vmatprep.subr.mxu0 0.0
    %271 = vmatpush2.msra.mxu0 0.0
    %272 = vmatprep.subr.mxu0 0.0
    %273 = vmatpush2.msra.mxu0 0.0
    %274 = vmatprep.subr.mxu0 0.0
    %275 = vmatpush2.msra.mxu0 0.0
    %276 = vmatprep.mubr.f32.mxu0 0.0
    %277 = vmatmul.mubr.f32.gmra.mxu0 %v188
    %v278 = vpop.f32.mrf.mxu0
    %v279 = vadd.f32 %v210, %v278
    %v280 = vpop.f32.mrf.mxu0
    %281 = vdwg.mxu0
    %v282 = vmax.f32 %v279, 0.0
    %vm283 = vcmp.ne.f32.partialorder %v279, %v279
    %v284 = vadd.f32 %v279, 0.0
    %v285 = vand.u32 2147483647, %v279
    %v286 = vsub.f32 0.0, %v285
    %v287 = vmul.f32 %v286, 1.442695
    %v288 = vpow.pop %v287
    %v289 = vadd.f32 %v288, 1.0
    %v290 = vlog2.pop %v289
    %v291 = vmul.f32 %v290, 0.6931472
    %v292 = vmul.f32 -0.5, %v288
    %v293 = vadd.f32 %v292, 1.0
    %v294 = vmul.f32 %v293, %v288
    %v295 = vand.u32 2147483647, %v288
    %vm296 = vcmp.lt.f32.partialorder %v295, 0.0004427343
    %v297 = vsel %vm296, %v294, %v291
    %v298 = vadd.f32 %v282, %v297
    %v299 = vsel %vm283, %v284, %v298
    %v300 = vld [vmem:[#allocation5] sm:$0xff]
    %v301 = vld [vmem:[#allocation5 + $0x8] sm:$0xff]
    %v302 = vld [vmem:[#allocation5 + $0x10] sm:$0xff]
    %v303 = vld [vmem:[#allocation5 + $0x18] sm:$0xff]
    %v304 = vld [vmem:[#allocation5 + $0x20] sm:$0xff]
    %v305 = vld [vmem:[#allocation5 + $0x28] sm:$0xff]
    %v306 = vld [vmem:[#allocation5 + $0x30] sm:$0xff]
    %v307 = vld [vmem:[#allocation5 + $0x38] sm:$0xff]
    %v308 = vld [vmem:[#allocation5 + $0x40] sm:$0xff]
    %v309 = vld [vmem:[#allocation5 + $0x48] sm:$0xff]
    %v310 = vld [vmem:[#allocation5 + $0x50] sm:$0xff]
    %v311 = vld [vmem:[#allocation5 + $0x58] sm:$0xff]
    %v312 = vld [vmem:[#allocation5 + $0x60] sm:$0xff]
    %v313 = vld [vmem:[#allocation5 + $0x68] sm:$0xff]
    %v314 = vld [vmem:[#allocation5 + $0x70] sm:$0xff]
    %v315 = vld [vmem:[#allocation5 + $0x78] sm:$0xff]
    %316 = vmatprep.subr.mxu0 0.0
    %317 = vmatpush1.msra.mxu0 %v315
    %318 = vmatprep.subr.mxu0 0.0
    %319 = vmatpush1.msra.mxu0 %v314
    %320 = vmatprep.subr.mxu0 0.0
    %321 = vmatpush1.msra.mxu0 %v313
    %322 = vmatprep.subr.mxu0 0.0
    %323 = vmatpush1.msra.mxu0 %v312
    %324 = vmatprep.subr.mxu0 0.0
    %325 = vmatpush1.msra.mxu0 %v311
    %326 = vmatprep.subr.mxu0 0.0
    %327 = vmatpush1.msra.mxu0 %v310
    %328 = vmatprep.subr.mxu0 0.0
    %329 = vmatpush1.msra.mxu0 %v309
    %330 = vmatprep.subr.mxu0 0.0
    %331 = vmatpush1.msra.mxu0 %v308
    %332 = vmatprep.subr.mxu0 0.0
    %333 = vmatpush1.msra.mxu0 %v307
    %334 = vmatprep.subr.mxu0 0.0
    %335 = vmatpush1.msra.mxu0 %v306
    %336 = vmatprep.subr.mxu0 0.0
    %337 = vmatpush1.msra.mxu0 %v305
    %338 = vmatprep.subr.mxu0 0.0
    %339 = vmatpush1.msra.mxu0 %v304
    %340 = vmatprep.subr.mxu0 0.0
    %341 = vmatpush1.msra.mxu0 %v303
    %342 = vmatprep.subr.mxu0 0.0
    %343 = vmatpush1.msra.mxu0 %v302
    %344 = vmatprep.subr.mxu0 0.0
    %345 = vmatpush1.msra.mxu0 %v301
    %346 = vmatprep.subr.mxu0 0.0
    %347 = vmatpush1.msra.mxu0 %v300
    %348 = vmatprep.subr.mxu0 0.0
    %349 = vmatpush2.msra.mxu0 0.0
    %350 = vmatprep.subr.mxu0 0.0
    %351 = vmatpush2.msra.mxu0 0.0
    %352 = vmatprep.subr.mxu0 0.0
    %353 = vmatpush2.msra.mxu0 0.0
    %354 = vmatprep.subr.mxu0 0.0
    %355 = vmatpush2.msra.mxu0 0.0
    %356 = vmatprep.subr.mxu0 0.0
    %357 = vmatpush2.msra.mxu0 0.0
    %358 = vmatprep.subr.mxu0 0.0
    %359 = vmatpush2.msra.mxu0 0.0
    %360 = vmatprep.subr.mxu0 0.0
    %361 = vmatpush2.msra.mxu0 0.0
    %362 = vmatprep.subr.mxu0 0.0
    %363 = vmatpush2.msra.mxu0 0.0
    %364 = vmatprep.subr.mxu0 0.0
    %365 = vmatpush2.msra.mxu0 0.0
    %366 = vmatprep.subr.mxu0 0.0
    %367 = vmatpush2.msra.mxu0 0.0
    %368 = vmatprep.subr.mxu0 0.0
    %369 = vmatpush2.msra.mxu0 0.0
    %370 = vmatprep.subr.mxu0 0.0
    %371 = vmatpush2.msra.mxu0 0.0
    %372 = vmatprep.subr.mxu0 0.0
    %373 = vmatpush2.msra.mxu0 0.0
    %374 = vmatprep.subr.mxu0 0.0
    %375 = vmatpush2.msra.mxu0 0.0
    %376 = vmatprep.subr.mxu0 0.0
    %377 = vmatpush2.msra.mxu0 0.0
    %378 = vmatprep.subr.mxu0 0.0
    %379 = vmatpush2.msra.mxu0 0.0
    %380 = vmatprep.mubr.f32.mxu0 0.0
    %381 = vmatmul.mubr.f32.gmra.mxu0 %v299
    %v382 = vpop.f32.mrf.mxu0
    %v383 = vadd.f32 0.0, %v382
    %v384 = vpop.f32.mrf.mxu0
    %385 = vdwg.mxu0
    %v386 = vadd.f32 %v161, %v383
    %v387 = vld [vmem:[%s6] sm:$0x1]
    %v389 = vlaneseq
    %v390 = vshrl.u32 %v389, 7
    %v391 = vsub.s32 0, %v390
    %v392 = vrot.slane %v387, %v391
    %v394 = vadd.f32 %v386, %v392
    %v395 = vmax.f32 %v394, 0.0
    %vm396 = vcmp.ne.f32.partialorder %v394, %v394
    %v397 = vadd.f32 %v394, 0.0
    %v398 = vand.u32 2147483647, %v394
    %v399 = vsub.f32 0.0, %v398
    %v400 = vmul.f32 %v399, 1.442695
    %v401 = vpow.pop %v400
    %v402 = vadd.f32 %v401, 1.0
    %v403 = vlog2.pop %v402
    %v404 = vmul.f32 %v403, 0.6931472
    %v405 = vmul.f32 -0.5, %v401
    %v406 = vadd.f32 %v405, 1.0
    %v407 = vmul.f32 %v406, %v401
    %v408 = vand.u32 2147483647, %v401
    %vm409 = vcmp.lt.f32.partialorder %v408, 0.0004427343
    %v410 = vsel %vm409, %v407, %v404
    %v411 = vadd.f32 %v395, %v410
    %v412 = vsel %vm396, %v397, %v411
    %v413 = vld [vmem:[#allocation7] sm:$0xff]
    %v414 = vld [vmem:[#allocation7 + $0x8] sm:$0xff]
    %v415 = vld [vmem:[#allocation7 + $0x10] sm:$0xff]
    %v416 = vld [vmem:[#allocation7 + $0x18] sm:$0xff]
    %v417 = vld [vmem:[#allocation7 + $0x20] sm:$0xff]
    %v418 = vld [vmem:[#allocation7 + $0x28] sm:$0xff]
    %v419 = vld [vmem:[#allocation7 + $0x30] sm:$0xff]
    %v420 = vld [vmem:[#allocation7 + $0x38] sm:$0xff]
    %v421 = vld [vmem:[#allocation7 + $0x40] sm:$0xff]
    %v422 = vld [vmem:[#allocation7 + $0x48] sm:$0xff]
    %v423 = vld [vmem:[#allocation7 + $0x50] sm:$0xff]
    %v424 = vld [vmem:[#allocation7 + $0x58] sm:$0xff]
    %v425 = vld [vmem:[#allocation7 + $0x60] sm:$0xff]
    %v426 = vld [vmem:[#allocation7 + $0x68] sm:$0xff]
    %v427 = vld [vmem:[#allocation7 + $0x70] sm:$0xff]
    %v428 = vld [vmem:[#allocation7 + $0x78] sm:$0xff]
    %v429 = vld [vmem:[%s8] sm:$0x1]
    %v431 = vlaneseq
    %v432 = vshrl.u32 %v431, 7
    %v433 = vsub.s32 0, %v432
    %v434 = vrot.slane %v429, %v433
    %436 = vmatprep.subr.mxu0 0.0
    %437 = vmatpush1.msra.mxu0 %v428
    %438 = vmatprep.subr.mxu0 0.0
    %439 = vmatpush1.msra.mxu0 %v427
    %440 = vmatprep.subr.mxu0 0.0
    %441 = vmatpush1.msra.mxu0 %v426
    %442 = vmatprep.subr.mxu0 0.0
    %443 = vmatpush1.msra.mxu0 %v425
    %444 = vmatprep.subr.mxu0 0.0
    %445 = vmatpush1.msra.mxu0 %v424
    %446 = vmatprep.subr.mxu0 0.0
    %447 = vmatpush1.msra.mxu0 %v423
    %448 = vmatprep.subr.mxu0 0.0
    %449 = vmatpush1.msra.mxu0 %v422
    %450 = vmatprep.subr.mxu0 0.0
    %451 = vmatpush1.msra.mxu0 %v421
    %452 = vmatprep.subr.mxu0 0.0
    %453 = vmatpush1.msra.mxu0 %v420
    %454 = vmatprep.subr.mxu0 0.0
    %455 = vmatpush1.msra.mxu0 %v419
    %456 = vmatprep.subr.mxu0 0.0
    %457 = vmatpush1.msra.mxu0 %v418
    %458 = vmatprep.subr.mxu0 0.0
    %459 = vmatpush1.msra.mxu0 %v417
    %460 = vmatprep.subr.mxu0 0.0
    %461 = vmatpush1.msra.mxu0 %v416
    %462 = vmatprep.subr.mxu0 0.0
    %463 = vmatpush1.msra.mxu0 %v415
    %464 = vmatprep.subr.mxu0 0.0
    %465 = vmatpush1.msra.mxu0 %v414
    %466 = vmatprep.subr.mxu0 0.0
    %467 = vmatpush1.msra.mxu0 %v413
    %468 = vmatprep.subr.mxu0 0.0
    %469 = vmatpush2.msra.mxu0 0.0
    %470 = vmatprep.subr.mxu0 0.0
    %471 = vmatpush2.msra.mxu0 0.0
    %472 = vmatprep.subr.mxu0 0.0
    %473 = vmatpush2.msra.mxu0 0.0
    %474 = vmatprep.subr.mxu0 0.0
    %475 = vmatpush2.msra.mxu0 0.0
    %476 = vmatprep.subr.mxu0 0.0
    %477 = vmatpush2.msra.mxu0 0.0
    %478 = vmatprep.subr.mxu0 0.0
    %479 = vmatpush2.msra.mxu0 0.0
    %480 = vmatprep.subr.mxu0 0.0
    %481 = vmatpush2.msra.mxu0 0.0
    %482 = vmatprep.subr.mxu0 0.0
    %483 = vmatpush2.msra.mxu0 0.0
    %484 = vmatprep.subr.mxu0 0.0
    %485 = vmatpush2.msra.mxu0 0.0
    %486 = vmatprep.subr.mxu0 0.0
    %487 = vmatpush2.msra.mxu0 0.0
    %488 = vmatprep.subr.mxu0 0.0
    %489 = vmatpush2.msra.mxu0 0.0
    %490 = vmatprep.subr.mxu0 0.0
    %491 = vmatpush2.msra.mxu0 0.0
    %492 = vmatprep.subr.mxu0 0.0
    %493 = vmatpush2.msra.mxu0 0.0
    %494 = vmatprep.subr.mxu0 0.0
    %495 = vmatpush2.msra.mxu0 0.0
    %496 = vmatprep.subr.mxu0 0.0
    %497 = vmatpush2.msra.mxu0 0.0
    %498 = vmatprep.subr.mxu0 0.0
    %499 = vmatpush2.msra.mxu0 0.0
    %500 = vmatprep.mubr.f32.mxu0 0.0
    %501 = vmatmul.mubr.f32.gmra.mxu0 %v412
    %v502 = vpop.f32.mrf.mxu0
    %v503 = vadd.f32 %v434, %v502
    %v504 = vpop.f32.mrf.mxu0
    %505 = vdwg.mxu0
    %v506 = vmax.f32 %v503, 0.0
    %vm507 = vcmp.ne.f32.partialorder %v503, %v503
    %v508 = vadd.f32 %v503, 0.0
    %v509 = vand.u32 2147483647, %v503
    %v510 = vsub.f32 0.0, %v509
    %v511 = vmul.f32 %v510, 1.442695
    %v512 = vpow.pop %v511
    %v513 = vadd.f32 %v512, 1.0
    %v514 = vlog2.pop %v513
    %v515 = vmul.f32 %v514, 0.6931472
    %v516 = vmul.f32 -0.5, %v512
    %v517 = vadd.f32 %v516, 1.0
    %v518 = vmul.f32 %v517, %v512
    %v519 = vand.u32 2147483647, %v512
    %vm520 = vcmp.lt.f32.partialorder %v519, 0.0004427343
    %v521 = vsel %vm520, %v518, %v515
    %v522 = vadd.f32 %v506, %v521
    %v523 = vsel %vm507, %v508, %v522
    %v524 = vld [vmem:[%s9] sm:$0xff]
    %v525 = vld [vmem:[%s9 + $0x8] sm:$0xff]
    %v526 = vld [vmem:[%s9 + $0x10] sm:$0xff]
    %v527 = vld [vmem:[%s9 + $0x18] sm:$0xff]
    %v528 = vld [vmem:[%s9 + $0x20] sm:$0xff]
    %v529 = vld [vmem:[%s9 + $0x28] sm:$0xff]
    %v530 = vld [vmem:[%s9 + $0x30] sm:$0xff]
    %v531 = vld [vmem:[%s9 + $0x38] sm:$0xff]
    %v532 = vld [vmem:[%s9 + $0x40] sm:$0xff]
    %v533 = vld [vmem:[%s9 + $0x48] sm:$0xff]
    %v534 = vld [vmem:[%s9 + $0x50] sm:$0xff]
    %v535 = vld [vmem:[%s9 + $0x58] sm:$0xff]
    %v536 = vld [vmem:[%s9 + $0x60] sm:$0xff]
    %v537 = vld [vmem:[%s9 + $0x68] sm:$0xff]
    %v538 = vld [vmem:[%s9 + $0x70] sm:$0xff]
    %v539 = vld [vmem:[%s9 + $0x78] sm:$0xff]
    %v540 = vld [vmem:[%s10] sm:$0x1]
    %v542 = vlaneseq
    %v543 = vshrl.u32 %v542, 7
    %v544 = vsub.s32 0, %v543
    %v545 = vrot.slane %v540, %v544
    %547 = vmatprep.subr.mxu0 0.0
    %548 = vmatpush1.msra.mxu0 %v539
    %549 = vmatprep.subr.mxu0 0.0
    %550 = vmatpush1.msra.mxu0 %v538
    %551 = vmatprep.subr.mxu0 0.0
    %552 = vmatpush1.msra.mxu0 %v537
    %553 = vmatprep.subr.mxu0 0.0
    %554 = vmatpush1.msra.mxu0 %v536
    %555 = vmatprep.subr.mxu0 0.0
    %556 = vmatpush1.msra.mxu0 %v535
    %557 = vmatprep.subr.mxu0 0.0
    %558 = vmatpush1.msra.mxu0 %v534
    %559 = vmatprep.subr.mxu0 0.0
    %560 = vmatpush1.msra.mxu0 %v533
    %561 = vmatprep.subr.mxu0 0.0
    %562 = vmatpush1.msra.mxu0 %v532
    %563 = vmatprep.subr.mxu0 0.0
    %564 = vmatpush1.msra.mxu0 %v531
    %565 = vmatprep.subr.mxu0 0.0
    %566 = vmatpush1.msra.mxu0 %v530
    %567 = vmatprep.subr.mxu0 0.0
    %568 = vmatpush1.msra.mxu0 %v529
    %569 = vmatprep.subr.mxu0 0.0
    %570 = vmatpush1.msra.mxu0 %v528
    %571 = vmatprep.subr.mxu0 0.0
    %572 = vmatpush1.msra.mxu0 %v527
    %573 = vmatprep.subr.mxu0 0.0
    %574 = vmatpush1.msra.mxu0 %v526
    %575 = vmatprep.subr.mxu0 0.0
    %576 = vmatpush1.msra.mxu0 %v525
    %577 = vmatprep.subr.mxu0 0.0
    %578 = vmatpush1.msra.mxu0 %v524
    %579 = vmatprep.subr.mxu0 0.0
    %580 = vmatpush2.msra.mxu0 0.0
    %581 = vmatprep.subr.mxu0 0.0
    %582 = vmatpush2.msra.mxu0 0.0
    %583 = vmatprep.subr.mxu0 0.0
    %584 = vmatpush2.msra.mxu0 0.0
    %585 = vmatprep.subr.mxu0 0.0
    %586 = vmatpush2.msra.mxu0 0.0
    %587 = vmatprep.subr.mxu0 0.0
    %588 = vmatpush2.msra.mxu0 0.0
    %589 = vmatprep.subr.mxu0 0.0
    %590 = vmatpush2.msra.mxu0 0.0
    %591 = vmatprep.subr.mxu0 0.0
    %592 = vmatpush2.msra.mxu0 0.0
    %593 = vmatprep.subr.mxu0 0.0
    %594 = vmatpush2.msra.mxu0 0.0
    %595 = vmatprep.subr.mxu0 0.0
    %596 = vmatpush2.msra.mxu0 0.0
    %597 = vmatprep.subr.mxu0 0.0
    %598 = vmatpush2.msra.mxu0 0.0
    %599 = vmatprep.subr.mxu0 0.0
    %600 = vmatpush2.msra.mxu0 0.0
    %601 = vmatprep.subr.mxu0 0.0
    %602 = vmatpush2.msra.mxu0 0.0
    %603 = vmatprep.subr.mxu0 0.0
    %604 = vmatpush2.msra.mxu0 0.0
    %605 = vmatprep.subr.mxu0 0.0
    %606 = vmatpush2.msra.mxu0 0.0
    %607 = vmatprep.subr.mxu0 0.0
    %608 = vmatpush2.msra.mxu0 0.0
    %609 = vmatprep.subr.mxu0 0.0
    %610 = vmatpush2.msra.mxu0 0.0
    %611 = vmatprep.mubr.f32.mxu0 0.0
    %612 = vmatmul.mubr.f32.gmra.mxu0 %v523
    %v613 = vpop.f32.mrf.mxu0
    %v614 = vadd.f32 %v545, %v613
    %v615 = vpop.f32.mrf.mxu0
    %616 = vdwg.mxu0
    %617 = vst.msk [vmem:[#allocation8] sm:$0xff] %vm81, %v614
    // Predicated region
    $region58: #{sonode_forward.1} parent=1 // pred_check
      _
    $region59: #{sonode_forward.1} parent=1 // pred_check_branch
      %619 = sbr.rel (0) target = $region61
    $region60: #{sonode_forward.1} parent=1 // pred_region
      %s621 = ssub.s32 128, 128
      %622 = vsyncadd [#allocation4], %s621
      %s624 = sshll.u32 [#allocation8], 4
      %s625 = int_to_ptr.vmem [resolvable:$true] %s624
      %627 = dma.vmem_to_hbm [thread:$0]  %s625, 128, %s11, [#allocation4]
    $region61: #{sonode_forward.1} parent=1 // pred_fallthru
      _
    // Predicated region
    $region62: #{sonode_forward.1} parent=1 // pred_check
      _
    $region63: #{sonode_forward.1} parent=1 // pred_check_branch
      %629 = sbr.rel (0) target = $region65
    $region64: #{sonode_forward.1} parent=1 // pred_region
      %630 = dma.done [#allocation4], 128
    $region65: #{sonode_forward.1} parent=1 // pred_fallthru
      _
    %631 = vsyncpa [#allocation3], 1
    %632 = vsyncpa [#allocation6], 1
    %633 = vsyncpa [#allocation4], 1

</llo_original>
